<compile_context>
chip_gen: v6e
topology: v6e:2x2x1
jax: 0.10.0
libtpu: 0.0.40
codegen_flags: <defaults>
</compile_context>

<pallas_src>
import functools

import jax
import jax.numpy as jnp
from jax import lax
from jax.experimental import pallas as pl
from jax.experimental.pallas import tpu as pltpu


# ------------------------------ constants / plan ------------------------------ #

_LANE = 128
_NODE_BLOCK = 8                 # one sublane group per deferred-update block
_MAX_TB = 2048
_MAX_SWEEPS_PER_CALL = 8        # rc rows per call stay small vs. the J tile


def _round_up(x, m):
    return ((x + m - 1) // m) * m


def _cdiv(a, b):
    return (a + b - 1) // b


def _vmem_capacity_bytes():
    try:
        info = pltpu.get_tpu_info()
        cap = getattr(info, "vmem_capacity_bytes", None)
        if cap:
            return int(cap)
    except Exception:
        pass
    return 64 << 20   # conservative fallback: v7x per-TensorCore VMEM


def _plan(n_pad, batch, j_bytes, max_sweeps=_MAX_SWEEPS_PER_CALL):
    """Pick the batch (lane) tile TB and padded batch B_pad (multiples of 128)."""
    cap = _vmem_capacity_bytes()
    budget = (cap * 5) // 8        # leave headroom for Mosaic internal scratch
    # Double-buffered working set per lane:
    #   J tile (j_bytes/elem) + f32 {s_in, f_in, s_out, f_out, K rc rows, 8 intra rows}
    per_lane = (2 * n_pad * n_pad * j_bytes
                + 8 * n_pad * (4 + max_sweeps + _NODE_BLOCK))
    tb = (budget // per_lane) // _LANE * _LANE
    if tb < _LANE:
        # TODO(synk): stream J's k axis (pltpu.emit_pipeline / manual double buffer)
        # to lift this ceiling for very large N instead of over-requesting VMEM.
        raise NotImplementedError(
            f"num_nodes(padded)={n_pad}: coupling block does not fit VMEM at a "
            "128-lane tile; k-axis streaming of J is required.")
    b128 = _round_up(max(batch, 1), _LANE)
    tb = min(tb, _MAX_TB, b128)
    n_tiles = _cdiv(b128, tb)
    if b128 >= 2 * _LANE and n_tiles < 2:
        n_tiles = 2                # engage both v7x TensorCores / overlap J DMA
    tb = _round_up(_cdiv(b128, n_tiles), _LANE)
    return tb, n_tiles * tb


def _vmem_limit_bytes(n_pad, tb, num_sweeps, j_bytes):
    cap = _vmem_capacity_bytes()
    need = tb * (2 * n_pad * n_pad * j_bytes
                 + 8 * n_pad * (4 + num_sweeps + _NODE_BLOCK))
    return int(min(max(need + (8 << 20), 32 << 20), (cap * 3) // 4))


# ------------------------------ layout helpers -------------------------------- #

def to_kernel_layout(x, n_pad, b_pad):
    """(R, S, N) -> (N_pad, B_pad), zero-padded nodes/lanes."""
    R, S, N = x.shape
    B = R * S
    xt = x.reshape(B, N).T
    return jnp.pad(xt, ((0, n_pad - N), (0, b_pad - B)))


def from_kernel_layout(xk, R, S, N):
    B = R * S
    return xk[:N, :B].T.reshape(R, S, N)


def rc_to_kernel_layout(rc, n_pad, b_pad):
    """(K, R, S, N) -> (K*N_pad, B_pad)."""
    K, R, S, N = rc.shape
    B = R * S
    rt = jnp.transpose(rc.reshape(K, B, N), (0, 2, 1))           # (K, N, B)
    rt = jnp.pad(rt, ((0, 0), (0, n_pad - N), (0, b_pad - B)))
    return rt.reshape(K * n_pad, b_pad)


def make_j_cols(j_sym, n_pad, b_pad, j_dtype):
    """(R,S,N,N) -> (N_j, N_k, B_pad) in j_dtype: j_cols[j, k, b] = J_sym[b, k, j]."""
    R, S, N, _ = j_sym.shape
    B = R * S
    jc = jnp.transpose(j_sym.reshape(B, N, N), (2, 1, 0))
    jc = jnp.pad(jc, ((0, n_pad - N), (0, n_pad - N), (0, b_pad - B)))
    return jc.astype(j_dtype)


def make_j_intra(j_eff, n_pad, b_pad):
    """Small f32 side table of intra-block couplings.

    j_intra[m2, t, b] = J_eff[b, t, (t//8)*8 + m2]   (what the deferred rank-8
    update will add to field row t when the m2-th node of t's block flips).
    """
    R, S, N, _ = j_eff.shape
    B = R * S
    je = jnp.pad(j_eff.reshape(B, N, N),
                 ((0, 0), (0, n_pad - N), (0, n_pad - N)))
    t_idx = jnp.arange(n_pad)
    cols = (t_idx // _NODE_BLOCK)[:, None] * _NODE_BLOCK + \
        jnp.arange(_NODE_BLOCK)[None, :]                          # (N_pad, 8)
    ji = jnp.take_along_axis(je, cols[None, :, :], axis=2)        # (B, N_pad, 8)
    ji = jnp.transpose(ji, (2, 1, 0))                             # (8, N_pad, B)
    return jnp.pad(ji, ((0, 0), (0, 0), (0, b_pad - B))).astype(jnp.float32)


# ------------------------------ Pallas kernel --------------------------------- #

def _ising_sweeps_kernel(s_ref, f_ref, rc_ref, j_ref, ji_ref, s_out, f_out,
                         *, n_pad, num_sweeps):
    """Run `num_sweeps` sequential Gibbs sweeps for one batch-lane tile.

    s_ref / f_ref / s_out / f_out : (N_pad, TB)              f32
    rc_ref                        : (num_sweeps*N_pad, TB)   f32
    j_ref                         : (N_pad, N_pad, TB)       bf16,  j_ref[j,k,b]=J_sym[b,k,j]
    ji_ref                        : (8, N_pad, TB)           f32 intra-block couplings

    The output blocks serve as the working buffers: s_out holds the current
    spins; f_out tracks field[k] = h[k] + sum_j J_sym[k,j]*s_cur[j] and is kept
    current with rank-8 deferred updates (valid because J_sym is symmetric and
    its zero diagonal never matters — each node is visited once per sweep).
    """
    NB = _NODE_BLOCK
    n_blocks = n_pad // NB

    s_out[...] = s_ref[...]
    f_out[...] = f_ref[...]

    def sweep_body(sweep, carry):
        rc_base = pl.multiple_of(sweep * n_pad, NB)

        def block_body(blk, carry_in):
            j0 = pl.multiple_of(blk * NB, NB)
            s_blk = s_out[pl.ds(j0, NB), :]                     # pre-flip spins of block
            f_blk = f_out[pl.ds(j0, NB), :]                     # fields before block flips
            rc_blk = rc_ref[pl.ds(rc_base + j0, NB), :]

            new_rows = []
            deltas = []
            for m in range(NB):                                  # static -> unrolled
                f_m = f_blk[m:m + 1, :]
                for m2 in range(m):                              # earlier flips in block
                    jmm = ji_ref[m2, pl.ds(j0 + m, 1), :]
                    f_m = f_m + jmm * deltas[m2]
                s_m = s_blk[m:m + 1, :]
                new_s = jnp.where(rc_blk[m:m + 1, :] > s_m * f_m, -s_m, s_m)
                new_rows.append(new_s)
                deltas.append(new_s - s_m)

            s_out[pl.ds(j0, NB), :] = jnp.concatenate(new_rows, axis=0)

            # Deferred rank-8 field update: ONE read + ONE write of (N_pad, TB);
            # the 8 J column rows are streamed once each (unavoidable J traffic).
            upd = f_out[...]
            for m in range(NB):                                  # static -> unrolled
                upd = upd + j_ref[j0 + m].astype(upd.dtype) * deltas[m]
            f_out[...] = upd
            return carry_in

        return lax.fori_loop(0, n_blocks, block_body, carry)

    lax.fori_loop(0, num_sweeps, sweep_body, 0)


def ising_sweeps_pallas(s_k, field_k, rc_k, j_cols, j_intra, *, num_sweeps, tb):
    """Apply `num_sweeps` Gibbs sweeps. All arrays are in kernel layout."""
    n_pad, b_pad = s_k.shape
    assert j_cols.shape == (n_pad, n_pad, b_pad)
    assert j_intra.shape == (_NODE_BLOCK, n_pad, b_pad)
    assert rc_k.shape == (num_sweeps * n_pad, b_pad)
    grid = (b_pad // tb,)
    j_bytes = jnp.dtype(j_cols.dtype).itemsize

    kernel = functools.partial(_ising_sweeps_kernel, n_pad=n_pad,
                               num_sweeps=num_sweeps)
    s_new, f_new = pl.pallas_call(
        kernel,
        out_shape=(jax.ShapeDtypeStruct((n_pad, b_pad), s_k.dtype),
                   jax.ShapeDtypeStruct((n_pad, b_pad), field_k.dtype)),
        grid=grid,
        in_specs=[
            pl.BlockSpec((n_pad, tb), lambda i: (0, i)),                 # spins
            pl.BlockSpec((n_pad, tb), lambda i: (0, i)),                 # carried field
            pl.BlockSpec((num_sweeps * n_pad, tb), lambda i: (0, i)),    # rc (all sweeps)
            pl.BlockSpec((n_pad, n_pad, tb), lambda i: (0, 0, i)),       # J columns (bf16)
            pl.BlockSpec((_NODE_BLOCK, n_pad, tb), lambda i: (0, 0, i)),  # intra-block J
        ],
        out_specs=(pl.BlockSpec((n_pad, tb), lambda i: (0, i)),
                   pl.BlockSpec((n_pad, tb), lambda i: (0, i))),
        input_output_aliases={0: 0, 1: 1},     # s and field updated in place in HBM
        compiler_params=pltpu.CompilerParams(
            dimension_semantics=("parallel",),  # batch tiles independent (megacore)
            vmem_limit_bytes=_vmem_limit_bytes(n_pad, tb, num_sweeps, j_bytes),
        ),
    )(s_k, field_k, rc_k, j_cols, j_intra)
    return s_new, f_new


# ------------------------------- Model wrapper --------------------------------- #

class IsingModelJAX:
    """JAX/Pallas port of IsingModel.__init__ + forward (one Ising step).

    Only the forward pass (do_ising_model_step) is kernelized; see TODOs below.
    """

    def __init__(self, reps_per_subject, num_subjects, num_nodes, beta=0.5,
                 dtype=jnp.float32, j_dtype=jnp.bfloat16, key=None):
        self.reps_per_subject = reps_per_subject
        self.num_subjects = num_subjects
        self.num_nodes = num_nodes
        self.beta = beta
        self.betaneg2 = -2.0 * beta
        self.inv_betaneg2 = 1.0 / self.betaneg2
        self.dtype = dtype
        self.j_dtype = j_dtype

        key = jax.random.PRNGKey(0) if key is None else key
        cvec = (reps_per_subject, num_subjects, num_nodes)
        msize = (reps_per_subject, num_subjects, num_nodes, num_nodes)

        self.h = jnp.zeros(cvec, dtype=dtype)
        J = jax.random.normal(key, msize, dtype=dtype)
        J_sym = J + jnp.swapaxes(J, -1, -2)
        idx = jnp.arange(num_nodes)
        diag = jnp.diagonal(J_sym, axis1=-2, axis2=-1)
        J_sym = J_sym.at[..., idx, idx].add(-diag)      # zero diagonal, symmetric
        self.J_sym = J_sym                              # NOTE: kernel requires symmetry
        # torch.randint(low=0, high=1) is always 0  ->  s = -1 everywhere
        s0 = -jnp.ones(cvec, dtype=dtype)

        # ---- persistent kernel-layout state ---------------------------------- #
        B = reps_per_subject * num_subjects
        self.batch = B
        self.n_pad = _round_up(num_nodes, _NODE_BLOCK)
        j_bytes = jnp.dtype(j_dtype).itemsize
        self._tb, self.b_pad = _plan(self.n_pad, B, j_bytes)
        self._max_sweeps = _MAX_SWEEPS_PER_CALL

        j_eff = self.j_sym_effective()
        self.j_cols = make_j_cols(J_sym, self.n_pad, self.b_pad, j_dtype)
        self.j_intra = make_j_intra(j_eff, self.n_pad, self.b_pad)
        self.s_k = to_kernel_layout(s0, self.n_pad, self.b_pad)
        # Carried field  h + J_eff^T s  — computed ONCE here, then maintained by
        # the kernel's rank-8 updates and aliased in/out every call.
        field0 = self.h + jnp.einsum('rskj,rsk->rsj', j_eff, s0)
        self.field_k = to_kernel_layout(field0, self.n_pad, self.b_pad)

    def j_sym_effective(self):
        """The (bf16-quantized) coupling the kernel actually uses, in f32."""
        return self.J_sym.astype(self.j_dtype).astype(self.dtype)

    def get_s(self):
        return from_kernel_layout(self.s_k, self.reps_per_subject,
                                  self.num_subjects, self.num_nodes)

    def get_field(self):
        return from_kernel_layout(self.field_k, self.reps_per_subject,
                                  self.num_subjects, self.num_nodes)

    @property
    def s(self):
        return self.get_s()

    def _apply(self, rc_k, num_sweeps):
        self.s_k, self.field_k = ising_sweeps_pallas(
            self.s_k, self.field_k, rc_k, self.j_cols, self.j_intra,
            num_sweeps=num_sweeps, tb=self._tb)

    def step_with_uniforms(self, u):
        """One Gibbs sweep with externally supplied U(0,1) randoms, shape (R,S,N)."""
        rc = jnp.asarray(self.inv_betaneg2, self.dtype) * jnp.log(u)
        self._apply(rc_to_kernel_layout(rc[None], self.n_pad, self.b_pad), 1)
        return self.get_s()

    def sweeps_with_uniforms(self, u):
        """K Gibbs sweeps (u: (K,R,S,N)); J is streamed once per <=8 sweeps."""
        K = u.shape[0]
        rc = jnp.asarray(self.inv_betaneg2, self.dtype) * jnp.log(u)
        start = 0
        while start < K:
            k = min(self._max_sweeps, K - start)
            rc_k = rc_to_kernel_layout(rc[start:start + k], self.n_pad, self.b_pad)
            self._apply(rc_k, k)
            start += k
        return self.get_s()

    def forward(self, rng_key):
        # torch.rand_like -> U[0,1). Clamp away from 0: the measure-zero u==0 event
        # gives log(0)=-inf (forced flip) in PyTorch; we exclude it.
        # TODO(synk): for very long simulations, generate rc in-kernel with
        # pltpu.prng_seed/prng_random_bits instead of streaming it from HBM.
        u = jax.random.uniform(
            rng_key, (self.reps_per_subject, self.num_subjects, self.num_nodes),
            dtype=self.dtype, minval=1e-7, maxval=1.0)
        return self.step_with_uniforms(u)

    # TODO(synk): simulate_and_record_mean_and_cov / fit / update_params /
    # get_fc / get_triu_flattened are plain dense JAX ops (outer products,
    # reductions, triu gathers) and are not kernelized here; update_params would
    # also need to refresh j_cols/j_intra and the carried field.


# ------------------------------ Pure-JAX reference ------------------------------ #

def ising_step_ref(s, h, j_sym, u, inv_betaneg2):
    rc = inv_betaneg2 * jnp.log(u)
    N = s.shape[-1]

    def body(j, s_cur):
        field = h[:, :, j] + jnp.sum(j_sym[:, :, :, j] * s_cur, axis=-1)
        sj = s_cur[:, :, j]
        flip = (rc[:, :, j] > sj * field).astype(s_cur.dtype)
        return s_cur.at[:, :, j].set(sj * (1.0 - 2.0 * flip))

    return lax.fori_loop(0, N, body, s)


# ----------------------------------- main --------------------------------------- #

if __name__ == "__main__":
    reps_per_subject, num_subjects, num_nodes = 2, 3, 16

    init_key, k1, k2 = jax.random.split(jax.random.PRNGKey(0), 3)
    model = IsingModelJAX(reps_per_subject, num_subjects, num_nodes,
                          beta=0.5, key=init_key)
    j_eff = model.j_sym_effective()      # kernel streams bf16 J; ref uses same values
    h = model.h
    s0 = model.get_s()

    # --- forward(): one Gibbs sweep --------------------------------------------- #
    u1 = jax.random.uniform(k1, s0.shape, dtype=s0.dtype, minval=1e-7, maxval=1.0)
    s1 = jax.block_until_ready(model.step_with_uniforms(u1))
    s1_ref = jax.block_until_ready(
        ising_step_ref(s0, h, j_eff, u1, model.inv_betaneg2))
    assert s1.shape == (reps_per_subject, num_subjects, num_nodes)
    assert jnp.allclose(s1, s1_ref), "Pallas kernel mismatch vs JAX reference (1 sweep)"

    # carried-field state must equal h + J_eff^T s after the sweep
    f1 = model.get_field()
    f1_ref = h + jnp.einsum('rskj,rsk->rsj', j_eff, s1_ref)
    assert jnp.allclose(f1, f1_ref, atol=1e-4, rtol=1e-4), "carried field drifted"

    # --- three more sweeps in a single kernel invocation (K=3) ------------------ #
    u3 = jax.random.uniform(k2, (3,) + s0.shape, dtype=s0.dtype,
                            minval=1e-7, maxval=1.0)
    s4 = jax.block_until_ready(model.sweeps_with_uniforms(u3))
    s_ref = s1_ref
    for k in range(3):
        s_ref = ising_step_ref(s_ref, h, j_eff, u3[k], model.inv_betaneg2)
    assert jnp.allclose(s4, s_ref), "Pallas kernel mismatch vs JAX reference (K sweeps)"

    print("KERNEL_OK")
</pallas_src>

<mosaic_0001>
module attributes {stable_mosaic.version = 11 : i64} {
  func.func @_ising_sweeps_kernel(%arg0: i32, %arg1: memref<16x128xf32, #tpu.memory_space<vmem>>, %arg2: memref<16x128xf32, #tpu.memory_space<vmem>>, %arg3: memref<16x128xf32, #tpu.memory_space<vmem>>, %arg4: memref<16x16x128xbf16, #tpu.memory_space<vmem>>, %arg5: memref<8x16x128xf32, #tpu.memory_space<vmem>>, %arg6: memref<16x128xf32, #tpu.memory_space<vmem>>, %arg7: memref<16x128xf32, #tpu.memory_space<vmem>>) attributes {dimension_semantics = [#tpu.dimension_semantics<parallel>], iteration_bounds = array<i64: 1>, scalar_prefetch = 0 : i64, scratch_operands = 0 : i64, tpu.core_type = #tpu.core_type<tc>, window_params = [{transform_indices = @transform_0, window_bounds = array<i64: 16, 128>}, {transform_indices = @transform_1, window_bounds = array<i64: 16, 128>}, {transform_indices = @transform_2, window_bounds = array<i64: 16, 128>}, {transform_indices = @transform_3, window_bounds = array<i64: 16, 16, 128>}, {transform_indices = @transform_4, window_bounds = array<i64: 8, 16, 128>}, {transform_indices = @transform_5, window_bounds = array<i64: 16, 128>}, {transform_indices = @transform_6, window_bounds = array<i64: 16, 128>}]} {
    %c0 = arith.constant 0 : index
    %c0_0 = arith.constant 0 : index
    %0 = vector.load %arg1[%c0, %c0_0] : memref<16x128xf32, #tpu.memory_space<vmem>>, vector<16x128xf32>
    %c0_1 = arith.constant 0 : index
    %c0_2 = arith.constant 0 : index
    %1 = vector.load %arg6[%c0_1, %c0_2] : memref<16x128xf32, #tpu.memory_space<vmem>>, vector<16x128xf32>
    tpu.vector_store %arg6[%c0_1, %c0_2], %0 {strides = array<i32>} : memref<16x128xf32, #tpu.memory_space<vmem>>, vector<16x128xf32>,
    %c0_3 = arith.constant 0 : index
    %c0_4 = arith.constant 0 : index
    %2 = vector.load %arg2[%c0_3, %c0_4] : memref<16x128xf32, #tpu.memory_space<vmem>>, vector<16x128xf32>
    %c0_5 = arith.constant 0 : index
    %c0_6 = arith.constant 0 : index
    %3 = vector.load %arg7[%c0_5, %c0_6] : memref<16x128xf32, #tpu.memory_space<vmem>>, vector<16x128xf32>
    tpu.vector_store %arg7[%c0_5, %c0_6], %2 {strides = array<i32>} : memref<16x128xf32, #tpu.memory_space<vmem>>, vector<16x128xf32>,
    %c0_i32 = arith.constant 0 : i32
    %c16_i32 = arith.constant 16 : i32
    %4 = arith.muli %c0_i32, %c16_i32 : i32
    %5 = tpu.assume_multiple %4, 8 : i32
    %c0_i32_7 = arith.constant 0 : i32
    %c2_i32 = arith.constant 2 : i32
    %6 = arith.addi %c0_i32_7, %c2_i32 : i32
    %c1_i32 = arith.constant 1 : i32
    scf.for %arg8 = %c0_i32_7 to %6 step %c1_i32  : i32 {
      %c8_i32 = arith.constant 8 : i32
      %7 = arith.muli %arg8, %c8_i32 : i32
      %8 = tpu.assume_multiple %7, 8 : i32
      %9 = arith.index_cast %8 : i32 to index
      %c0_10 = arith.constant 0 : index
      %10 = vector.load %arg6[%9, %c0_10] : memref<16x128xf32, #tpu.memory_space<vmem>>, vector<8x128xf32>
      %11 = arith.index_cast %8 : i32 to index
      %c0_11 = arith.constant 0 : index
      %12 = vector.load %arg7[%11, %c0_11] : memref<16x128xf32, #tpu.memory_space<vmem>>, vector<8x128xf32>
      %13 = arith.addi %5, %8 : i32
      %14 = arith.index_cast %13 : i32 to index
      %c0_12 = arith.constant 0 : index
      %15 = vector.load %arg3[%14, %c0_12] : memref<16x128xf32, #tpu.memory_space<vmem>>, vector<8x128xf32>
      %16 = vector.extract_strided_slice %12 {offsets = [0, 0], sizes = [1, 128], strides = [1, 1]} : vector<8x128xf32> to vector<1x128xf32>
      %17 = vector.extract_strided_slice %10 {offsets = [0, 0], sizes = [1, 128], strides = [1, 1]} : vector<8x128xf32> to vector<1x128xf32>
      %18 = vector.extract_strided_slice %15 {offsets = [0, 0], sizes = [1, 128], strides = [1, 1]} : vector<8x128xf32> to vector<1x128xf32>
      %19 = arith.mulf %17, %16 : vector<1x128xf32>
      %20 = arith.cmpf ogt, %18, %19 : vector<1x128xf32>
      %cst = arith.constant 0.000000e+00 : f32
      %21 = vector.broadcast %cst : f32 to vector<1x128xf32>
      %22 = arith.subf %21, %17 : vector<1x128xf32>
      %23 = arith.select %20, %22, %17 : vector<1x128xi1>, vector<1x128xf32>
      %24 = arith.subf %23, %17 : vector<1x128xf32>
      %25 = vector.extract_strided_slice %12 {offsets = [1, 0], sizes = [1, 128], strides = [1, 1]} : vector<8x128xf32> to vector<1x128xf32>
      %c1_i32_13 = arith.constant 1 : i32
      %26 = arith.addi %8, %c1_i32_13 : i32
      %c0_14 = arith.constant 0 : index
      %27 = arith.index_cast %26 : i32 to index
      %c0_15 = arith.constant 0 : index
      %28 = vector.load %arg5[%c0_14, %27, %c0_15] : memref<8x16x128xf32, #tpu.memory_space<vmem>>, vector<1x1x128xf32>
      %29 = vector.shape_cast %28 : vector<1x1x128xf32> to vector<1x128xf32>
      %30 = arith.mulf %29, %24 : vector<1x128xf32>
      %31 = arith.addf %25, %30 : vector<1x128xf32>
      %32 = vector.extract_strided_slice %10 {offsets = [1, 0], sizes = [1, 128], strides = [1, 1]} : vector<8x128xf32> to vector<1x128xf32>
      %33 = vector.extract_strided_slice %15 {offsets = [1, 0], sizes = [1, 128], strides = [1, 1]} : vector<8x128xf32> to vector<1x128xf32>
      %34 = arith.mulf %32, %31 : vector<1x128xf32>
      %35 = arith.cmpf ogt, %33, %34 : vector<1x128xf32>
      %cst_16 = arith.constant 0.000000e+00 : f32
      %36 = vector.broadcast %cst_16 : f32 to vector<1x128xf32>
      %37 = arith.subf %36, %32 : vector<1x128xf32>
      %38 = arith.select %35, %37, %32 : vector<1x128xi1>, vector<1x128xf32>
      %39 = arith.subf %38, %32 : vector<1x128xf32>
      %40 = vector.extract_strided_slice %12 {offsets = [2, 0], sizes = [1, 128], strides = [1, 1]} : vector<8x128xf32> to vector<1x128xf32>
      %c2_i32_17 = arith.constant 2 : i32
      %41 = arith.addi %8, %c2_i32_17 : i32
      %c0_18 = arith.constant 0 : index
      %42 = arith.index_cast %41 : i32 to index
      %c0_19 = arith.constant 0 : index
      %43 = vector.load %arg5[%c0_18, %42, %c0_19] : memref<8x16x128xf32, #tpu.memory_space<vmem>>, vector<1x1x128xf32>
      %44 = vector.shape_cast %43 : vector<1x1x128xf32> to vector<1x128xf32>
      %45 = arith.mulf %44, %24 : vector<1x128xf32>
      %46 = arith.addf %40, %45 : vector<1x128xf32>
      %c2_i32_20 = arith.constant 2 : i32
      %47 = arith.addi %8, %c2_i32_20 : i32
      %c1 = arith.constant 1 : index
      %48 = arith.index_cast %47 : i32 to index
      %c0_21 = arith.constant 0 : index
      %49 = vector.load %arg5[%c1, %48, %c0_21] : memref<8x16x128xf32, #tpu.memory_space<vmem>>, vector<1x1x128xf32>
      %50 = vector.shape_cast %49 : vector<1x1x128xf32> to vector<1x128xf32>
      %51 = arith.mulf %50, %39 : vector<1x128xf32>
      %52 = arith.addf %46, %51 : vector<1x128xf32>
      %53 = vector.extract_strided_slice %10 {offsets = [2, 0], sizes = [1, 128], strides = [1, 1]} : vector<8x128xf32> to vector<1x128xf32>
      %54 = vector.extract_strided_slice %15 {offsets = [2, 0], sizes = [1, 128], strides = [1, 1]} : vector<8x128xf32> to vector<1x128xf32>
      %55 = arith.mulf %53, %52 : vector<1x128xf32>
      %56 = arith.cmpf ogt, %54, %55 : vector<1x128xf32>
      %cst_22 = arith.constant 0.000000e+00 : f32
      %57 = vector.broadcast %cst_22 : f32 to vector<1x128xf32>
      %58 = arith.subf %57, %53 : vector<1x128xf32>
      %59 = arith.select %56, %58, %53 : vector<1x128xi1>, vector<1x128xf32>
      %60 = arith.subf %59, %53 : vector<1x128xf32>
      %61 = vector.extract_strided_slice %12 {offsets = [3, 0], sizes = [1, 128], strides = [1, 1]} : vector<8x128xf32> to vector<1x128xf32>
      %c3_i32 = arith.constant 3 : i32
      %62 = arith.addi %8, %c3_i32 : i32
      %c0_23 = arith.constant 0 : index
      %63 = arith.index_cast %62 : i32 to index
      %c0_24 = arith.constant 0 : index
      %64 = vector.load %arg5[%c0_23, %63, %c0_24] : memref<8x16x128xf32, #tpu.memory_space<vmem>>, vector<1x1x128xf32>
      %65 = vector.shape_cast %64 : vector<1x1x128xf32> to vector<1x128xf32>
      %66 = arith.mulf %65, %24 : vector<1x128xf32>
      %67 = arith.addf %61, %66 : vector<1x128xf32>
      %c3_i32_25 = arith.constant 3 : i32
      %68 = arith.addi %8, %c3_i32_25 : i32
      %c1_26 = arith.constant 1 : index
      %69 = arith.index_cast %68 : i32 to index
      %c0_27 = arith.constant 0 : index
      %70 = vector.load %arg5[%c1_26, %69, %c0_27] : memref<8x16x128xf32, #tpu.memory_space<vmem>>, vector<1x1x128xf32>
      %71 = vector.shape_cast %70 : vector<1x1x128xf32> to vector<1x128xf32>
      %72 = arith.mulf %71, %39 : vector<1x128xf32>
      %73 = arith.addf %67, %72 : vector<1x128xf32>
      %c3_i32_28 = arith.constant 3 : i32
      %74 = arith.addi %8, %c3_i32_28 : i32
      %c2 = arith.constant 2 : index
      %75 = arith.index_cast %74 : i32 to index
      %c0_29 = arith.constant 0 : index
      %76 = vector.load %arg5[%c2, %75, %c0_29] : memref<8x16x128xf32, #tpu.memory_space<vmem>>, vector<1x1x128xf32>
      %77 = vector.shape_cast %76 : vector<1x1x128xf32> to vector<1x128xf32>
      %78 = arith.mulf %77, %60 : vector<1x128xf32>
      %79 = arith.addf %73, %78 : vector<1x128xf32>
      %80 = vector.extract_strided_slice %10 {offsets = [3, 0], sizes = [1, 128], strides = [1, 1]} : vector<8x128xf32> to vector<1x128xf32>
      %81 = vector.extract_strided_slice %15 {offsets = [3, 0], sizes = [1, 128], strides = [1, 1]} : vector<8x128xf32> to vector<1x128xf32>
      %82 = arith.mulf %80, %79 : vector<1x128xf32>
      %83 = arith.cmpf ogt, %81, %82 : vector<1x128xf32>
      %cst_30 = arith.constant 0.000000e+00 : f32
      %84 = vector.broadcast %cst_30 : f32 to vector<1x128xf32>
      %85 = arith.subf %84, %80 : vector<1x128xf32>
      %86 = arith.select %83, %85, %80 : vector<1x128xi1>, vector<1x128xf32>
      %87 = arith.subf %86, %80 : vector<1x128xf32>
      %88 = vector.extract_strided_slice %12 {offsets = [4, 0], sizes = [1, 128], strides = [1, 1]} : vector<8x128xf32> to vector<1x128xf32>
      %c4_i32 = arith.constant 4 : i32
      %89 = arith.addi %8, %c4_i32 : i32
      %c0_31 = arith.constant 0 : index
      %90 = arith.index_cast %89 : i32 to index
      %c0_32 = arith.constant 0 : index
      %91 = vector.load %arg5[%c0_31, %90, %c0_32] : memref<8x16x128xf32, #tpu.memory_space<vmem>>, vector<1x1x128xf32>
      %92 = vector.shape_cast %91 : vector<1x1x128xf32> to vector<1x128xf32>
      %93 = arith.mulf %92, %24 : vector<1x128xf32>
      %94 = arith.addf %88, %93 : vector<1x128xf32>
      %c4_i32_33 = arith.constant 4 : i32
      %95 = arith.addi %8, %c4_i32_33 : i32
      %c1_34 = arith.constant 1 : index
      %96 = arith.index_cast %95 : i32 to index
      %c0_35 = arith.constant 0 : index
      %97 = vector.load %arg5[%c1_34, %96, %c0_35] : memref<8x16x128xf32, #tpu.memory_space<vmem>>, vector<1x1x128xf32>
      %98 = vector.shape_cast %97 : vector<1x1x128xf32> to vector<1x128xf32>
      %99 = arith.mulf %98, %39 : vector<1x128xf32>
      %100 = arith.addf %94, %99 : vector<1x128xf32>
      %c4_i32_36 = arith.constant 4 : i32
      %101 = arith.addi %8, %c4_i32_36 : i32
      %c2_37 = arith.constant 2 : index
      %102 = arith.index_cast %101 : i32 to index
      %c0_38 = arith.constant 0 : index
      %103 = vector.load %arg5[%c2_37, %102, %c0_38] : memref<8x16x128xf32, #tpu.memory_space<vmem>>, vector<1x1x128xf32>
      %104 = vector.shape_cast %103 : vector<1x1x128xf32> to vector<1x128xf32>
      %105 = arith.mulf %104, %60 : vector<1x128xf32>
      %106 = arith.addf %100, %105 : vector<1x128xf32>
      %c4_i32_39 = arith.constant 4 : i32
      %107 = arith.addi %8, %c4_i32_39 : i32
      %c3 = arith.constant 3 : index
      %108 = arith.index_cast %107 : i32 to index
      %c0_40 = arith.constant 0 : index
      %109 = vector.load %arg5[%c3, %108, %c0_40] : memref<8x16x128xf32, #tpu.memory_space<vmem>>, vector<1x1x128xf32>
      %110 = vector.shape_cast %109 : vector<1x1x128xf32> to vector<1x128xf32>
      %111 = arith.mulf %110, %87 : vector<1x128xf32>
      %112 = arith.addf %106, %111 : vector<1x128xf32>
      %113 = vector.extract_strided_slice %10 {offsets = [4, 0], sizes = [1, 128], strides = [1, 1]} : vector<8x128xf32> to vector<1x128xf32>
      %114 = vector.extract_strided_slice %15 {offsets = [4, 0], sizes = [1, 128], strides = [1, 1]} : vector<8x128xf32> to vector<1x128xf32>
      %115 = arith.mulf %113, %112 : vector<1x128xf32>
      %116 = arith.cmpf ogt, %114, %115 : vector<1x128xf32>
      %cst_41 = arith.constant 0.000000e+00 : f32
      %117 = vector.broadcast %cst_41 : f32 to vector<1x128xf32>
      %118 = arith.subf %117, %113 : vector<1x128xf32>
      %119 = arith.select %116, %118, %113 : vector<1x128xi1>, vector<1x128xf32>
      %120 = arith.subf %119, %113 : vector<1x128xf32>
      %121 = vector.extract_strided_slice %12 {offsets = [5, 0], sizes = [1, 128], strides = [1, 1]} : vector<8x128xf32> to vector<1x128xf32>
      %c5_i32 = arith.constant 5 : i32
      %122 = arith.addi %8, %c5_i32 : i32
      %c0_42 = arith.constant 0 : index
      %123 = arith.index_cast %122 : i32 to index
      %c0_43 = arith.constant 0 : index
      %124 = vector.load %arg5[%c0_42, %123, %c0_43] : memref<8x16x128xf32, #tpu.memory_space<vmem>>, vector<1x1x128xf32>
      %125 = vector.shape_cast %124 : vector<1x1x128xf32> to vector<1x128xf32>
      %126 = arith.mulf %125, %24 : vector<1x128xf32>
      %127 = arith.addf %121, %126 : vector<1x128xf32>
      %c5_i32_44 = arith.constant 5 : i32
      %128 = arith.addi %8, %c5_i32_44 : i32
      %c1_45 = arith.constant 1 : index
      %129 = arith.index_cast %128 : i32 to index
      %c0_46 = arith.constant 0 : index
      %130 = vector.load %arg5[%c1_45, %129, %c0_46] : memref<8x16x128xf32, #tpu.memory_space<vmem>>, vector<1x1x128xf32>
      %131 = vector.shape_cast %130 : vector<1x1x128xf32> to vector<1x128xf32>
      %132 = arith.mulf %131, %39 : vector<1x128xf32>
      %133 = arith.addf %127, %132 : vector<1x128xf32>
      %c5_i32_47 = arith.constant 5 : i32
      %134 = arith.addi %8, %c5_i32_47 : i32
      %c2_48 = arith.constant 2 : index
      %135 = arith.index_cast %134 : i32 to index
      %c0_49 = arith.constant 0 : index
      %136 = vector.load %arg5[%c2_48, %135, %c0_49] : memref<8x16x128xf32, #tpu.memory_space<vmem>>, vector<1x1x128xf32>
      %137 = vector.shape_cast %136 : vector<1x1x128xf32> to vector<1x128xf32>
      %138 = arith.mulf %137, %60 : vector<1x128xf32>
      %139 = arith.addf %133, %138 : vector<1x128xf32>
      %c5_i32_50 = arith.constant 5 : i32
      %140 = arith.addi %8, %c5_i32_50 : i32
      %c3_51 = arith.constant 3 : index
      %141 = arith.index_cast %140 : i32 to index
      %c0_52 = arith.constant 0 : index
      %142 = vector.load %arg5[%c3_51, %141, %c0_52] : memref<8x16x128xf32, #tpu.memory_space<vmem>>, vector<1x1x128xf32>
      %143 = vector.shape_cast %142 : vector<1x1x128xf32> to vector<1x128xf32>
      %144 = arith.mulf %143, %87 : vector<1x128xf32>
      %145 = arith.addf %139, %144 : vector<1x128xf32>
      %c5_i32_53 = arith.constant 5 : i32
      %146 = arith.addi %8, %c5_i32_53 : i32
      %c4 = arith.constant 4 : index
      %147 = arith.index_cast %146 : i32 to index
      %c0_54 = arith.constant 0 : index
      %148 = vector.load %arg5[%c4, %147, %c0_54] : memref<8x16x128xf32, #tpu.memory_space<vmem>>, vector<1x1x128xf32>
      %149 = vector.shape_cast %148 : vector<1x1x128xf32> to vector<1x128xf32>
      %150 = arith.mulf %149, %120 : vector<1x128xf32>
      %151 = arith.addf %145, %150 : vector<1x128xf32>
      %152 = vector.extract_strided_slice %10 {offsets = [5, 0], sizes = [1, 128], strides = [1, 1]} : vector<8x128xf32> to vector<1x128xf32>
      %153 = vector.extract_strided_slice %15 {offsets = [5, 0], sizes = [1, 128], strides = [1, 1]} : vector<8x128xf32> to vector<1x128xf32>
      %154 = arith.mulf %152, %151 : vector<1x128xf32>
      %155 = arith.cmpf ogt, %153, %154 : vector<1x128xf32>
      %cst_55 = arith.constant 0.000000e+00 : f32
      %156 = vector.broadcast %cst_55 : f32 to vector<1x128xf32>
      %157 = arith.subf %156, %152 : vector<1x128xf32>
      %158 = arith.select %155, %157, %152 : vector<1x128xi1>, vector<1x128xf32>
      %159 = arith.subf %158, %152 : vector<1x128xf32>
      %160 = vector.extract_strided_slice %12 {offsets = [6, 0], sizes = [1, 128], strides = [1, 1]} : vector<8x128xf32> to vector<1x128xf32>
      %c6_i32 = arith.constant 6 : i32
      %161 = arith.addi %8, %c6_i32 : i32
      %c0_56 = arith.constant 0 : index
      %162 = arith.index_cast %161 : i32 to index
      %c0_57 = arith.constant 0 : index
      %163 = vector.load %arg5[%c0_56, %162, %c0_57] : memref<8x16x128xf32, #tpu.memory_space<vmem>>, vector<1x1x128xf32>
      %164 = vector.shape_cast %163 : vector<1x1x128xf32> to vector<1x128xf32>
      %165 = arith.mulf %164, %24 : vector<1x128xf32>
      %166 = arith.addf %160, %165 : vector<1x128xf32>
      %c6_i32_58 = arith.constant 6 : i32
      %167 = arith.addi %8, %c6_i32_58 : i32
      %c1_59 = arith.constant 1 : index
      %168 = arith.index_cast %167 : i32 to index
      %c0_60 = arith.constant 0 : index
      %169 = vector.load %arg5[%c1_59, %168, %c0_60] : memref<8x16x128xf32, #tpu.memory_space<vmem>>, vector<1x1x128xf32>
      %170 = vector.shape_cast %169 : vector<1x1x128xf32> to vector<1x128xf32>
      %171 = arith.mulf %170, %39 : vector<1x128xf32>
      %172 = arith.addf %166, %171 : vector<1x128xf32>
      %c6_i32_61 = arith.constant 6 : i32
      %173 = arith.addi %8, %c6_i32_61 : i32
      %c2_62 = arith.constant 2 : index
      %174 = arith.index_cast %173 : i32 to index
      %c0_63 = arith.constant 0 : index
      %175 = vector.load %arg5[%c2_62, %174, %c0_63] : memref<8x16x128xf32, #tpu.memory_space<vmem>>, vector<1x1x128xf32>
      %176 = vector.shape_cast %175 : vector<1x1x128xf32> to vector<1x128xf32>
      %177 = arith.mulf %176, %60 : vector<1x128xf32>
      %178 = arith.addf %172, %177 : vector<1x128xf32>
      %c6_i32_64 = arith.constant 6 : i32
      %179 = arith.addi %8, %c6_i32_64 : i32
      %c3_65 = arith.constant 3 : index
      %180 = arith.index_cast %179 : i32 to index
      %c0_66 = arith.constant 0 : index
      %181 = vector.load %arg5[%c3_65, %180, %c0_66] : memref<8x16x128xf32, #tpu.memory_space<vmem>>, vector<1x1x128xf32>
      %182 = vector.shape_cast %181 : vector<1x1x128xf32> to vector<1x128xf32>
      %183 = arith.mulf %182, %87 : vector<1x128xf32>
      %184 = arith.addf %178, %183 : vector<1x128xf32>
      %c6_i32_67 = arith.constant 6 : i32
      %185 = arith.addi %8, %c6_i32_67 : i32
      %c4_68 = arith.constant 4 : index
      %186 = arith.index_cast %185 : i32 to index
      %c0_69 = arith.constant 0 : index
      %187 = vector.load %arg5[%c4_68, %186, %c0_69] : memref<8x16x128xf32, #tpu.memory_space<vmem>>, vector<1x1x128xf32>
      %188 = vector.shape_cast %187 : vector<1x1x128xf32> to vector<1x128xf32>
      %189 = arith.mulf %188, %120 : vector<1x128xf32>
      %190 = arith.addf %184, %189 : vector<1x128xf32>
      %c6_i32_70 = arith.constant 6 : i32
      %191 = arith.addi %8, %c6_i32_70 : i32
      %c5 = arith.constant 5 : index
      %192 = arith.index_cast %191 : i32 to index
      %c0_71 = arith.constant 0 : index
      %193 = vector.load %arg5[%c5, %192, %c0_71] : memref<8x16x128xf32, #tpu.memory_space<vmem>>, vector<1x1x128xf32>
      %194 = vector.shape_cast %193 : vector<1x1x128xf32> to vector<1x128xf32>
      %195 = arith.mulf %194, %159 : vector<1x128xf32>
      %196 = arith.addf %190, %195 : vector<1x128xf32>
      %197 = vector.extract_strided_slice %10 {offsets = [6, 0], sizes = [1, 128], strides = [1, 1]} : vector<8x128xf32> to vector<1x128xf32>
      %198 = vector.extract_strided_slice %15 {offsets = [6, 0], sizes = [1, 128], strides = [1, 1]} : vector<8x128xf32> to vector<1x128xf32>
      %199 = arith.mulf %197, %196 : vector<1x128xf32>
      %200 = arith.cmpf ogt, %198, %199 : vector<1x128xf32>
      %cst_72 = arith.constant 0.000000e+00 : f32
      %201 = vector.broadcast %cst_72 : f32 to vector<1x128xf32>
      %202 = arith.subf %201, %197 : vector<1x128xf32>
      %203 = arith.select %200, %202, %197 : vector<1x128xi1>, vector<1x128xf32>
      %204 = arith.subf %203, %197 : vector<1x128xf32>
      %205 = vector.extract_strided_slice %12 {offsets = [7, 0], sizes = [1, 128], strides = [1, 1]} : vector<8x128xf32> to vector<1x128xf32>
      %c7_i32 = arith.constant 7 : i32
      %206 = arith.addi %8, %c7_i32 : i32
      %c0_73 = arith.constant 0 : index
      %207 = arith.index_cast %206 : i32 to index
      %c0_74 = arith.constant 0 : index
      %208 = vector.load %arg5[%c0_73, %207, %c0_74] : memref<8x16x128xf32, #tpu.memory_space<vmem>>, vector<1x1x128xf32>
      %209 = vector.shape_cast %208 : vector<1x1x128xf32> to vector<1x128xf32>
      %210 = arith.mulf %209, %24 : vector<1x128xf32>
      %211 = arith.addf %205, %210 : vector<1x128xf32>
      %c7_i32_75 = arith.constant 7 : i32
      %212 = arith.addi %8, %c7_i32_75 : i32
      %c1_76 = arith.constant 1 : index
      %213 = arith.index_cast %212 : i32 to index
      %c0_77 = arith.constant 0 : index
      %214 = vector.load %arg5[%c1_76, %213, %c0_77] : memref<8x16x128xf32, #tpu.memory_space<vmem>>, vector<1x1x128xf32>
      %215 = vector.shape_cast %214 : vector<1x1x128xf32> to vector<1x128xf32>
      %216 = arith.mulf %215, %39 : vector<1x128xf32>
      %217 = arith.addf %211, %216 : vector<1x128xf32>
      %c7_i32_78 = arith.constant 7 : i32
      %218 = arith.addi %8, %c7_i32_78 : i32
      %c2_79 = arith.constant 2 : index
      %219 = arith.index_cast %218 : i32 to index
      %c0_80 = arith.constant 0 : index
      %220 = vector.load %arg5[%c2_79, %219, %c0_80] : memref<8x16x128xf32, #tpu.memory_space<vmem>>, vector<1x1x128xf32>
      %221 = vector.shape_cast %220 : vector<1x1x128xf32> to vector<1x128xf32>
      %222 = arith.mulf %221, %60 : vector<1x128xf32>
      %223 = arith.addf %217, %222 : vector<1x128xf32>
      %c7_i32_81 = arith.constant 7 : i32
      %224 = arith.addi %8, %c7_i32_81 : i32
      %c3_82 = arith.constant 3 : index
      %225 = arith.index_cast %224 : i32 to index
      %c0_83 = arith.constant 0 : index
      %226 = vector.load %arg5[%c3_82, %225, %c0_83] : memref<8x16x128xf32, #tpu.memory_space<vmem>>, vector<1x1x128xf32>
      %227 = vector.shape_cast %226 : vector<1x1x128xf32> to vector<1x128xf32>
      %228 = arith.mulf %227, %87 : vector<1x128xf32>
      %229 = arith.addf %223, %228 : vector<1x128xf32>
      %c7_i32_84 = arith.constant 7 : i32
      %230 = arith.addi %8, %c7_i32_84 : i32
      %c4_85 = arith.constant 4 : index
      %231 = arith.index_cast %230 : i32 to index
      %c0_86 = arith.constant 0 : index
      %232 = vector.load %arg5[%c4_85, %231, %c0_86] : memref<8x16x128xf32, #tpu.memory_space<vmem>>, vector<1x1x128xf32>
      %233 = vector.shape_cast %232 : vector<1x1x128xf32> to vector<1x128xf32>
      %234 = arith.mulf %233, %120 : vector<1x128xf32>
      %235 = arith.addf %229, %234 : vector<1x128xf32>
      %c7_i32_87 = arith.constant 7 : i32
      %236 = arith.addi %8, %c7_i32_87 : i32
      %c5_88 = arith.constant 5 : index
      %237 = arith.index_cast %236 : i32 to index
      %c0_89 = arith.constant 0 : index
      %238 = vector.load %arg5[%c5_88, %237, %c0_89] : memref<8x16x128xf32, #tpu.memory_space<vmem>>, vector<1x1x128xf32>
      %239 = vector.shape_cast %238 : vector<1x1x128xf32> to vector<1x128xf32>
      %240 = arith.mulf %239, %159 : vector<1x128xf32>
      %241 = arith.addf %235, %240 : vector<1x128xf32>
      %c7_i32_90 = arith.constant 7 : i32
      %242 = arith.addi %8, %c7_i32_90 : i32
      %c6 = arith.constant 6 : index
      %243 = arith.index_cast %242 : i32 to index
      %c0_91 = arith.constant 0 : index
      %244 = vector.load %arg5[%c6, %243, %c0_91] : memref<8x16x128xf32, #tpu.memory_space<vmem>>, vector<1x1x128xf32>
      %245 = vector.shape_cast %244 : vector<1x1x128xf32> to vector<1x128xf32>
      %246 = arith.mulf %245, %204 : vector<1x128xf32>
      %247 = arith.addf %241, %246 : vector<1x128xf32>
      %248 = vector.extract_strided_slice %10 {offsets = [7, 0], sizes = [1, 128], strides = [1, 1]} : vector<8x128xf32> to vector<1x128xf32>
      %249 = vector.extract_strided_slice %15 {offsets = [7, 0], sizes = [1, 128], strides = [1, 1]} : vector<8x128xf32> to vector<1x128xf32>
      %250 = arith.mulf %248, %247 : vector<1x128xf32>
      %251 = arith.cmpf ogt, %249, %250 : vector<1x128xf32>
      %cst_92 = arith.constant 0.000000e+00 : f32
      %252 = vector.broadcast %cst_92 : f32 to vector<1x128xf32>
      %253 = arith.subf %252, %248 : vector<1x128xf32>
      %254 = arith.select %251, %253, %248 : vector<1x128xi1>, vector<1x128xf32>
      %255 = arith.subf %254, %248 : vector<1x128xf32>
      %256 = tpu.concatenate %23, %38, %59, %86, %119, %158, %203, %254 in 0 : vector<1x128xf32>, vector<1x128xf32>, vector<1x128xf32>, vector<1x128xf32>, vector<1x128xf32>, vector<1x128xf32>, vector<1x128xf32>, vector<1x128xf32> -> vector<8x128xf32>
      %257 = arith.index_cast %8 : i32 to index
      %c0_93 = arith.constant 0 : index
      %258 = vector.load %arg6[%257, %c0_93] : memref<16x128xf32, #tpu.memory_space<vmem>>, vector<8x128xf32>
      tpu.vector_store %arg6[%257, %c0_93], %256 {strides = array<i32>} : memref<16x128xf32, #tpu.memory_space<vmem>>, vector<8x128xf32>,
      %c0_94 = arith.constant 0 : index
      %c0_95 = arith.constant 0 : index
      %259 = vector.load %arg7[%c0_94, %c0_95] : memref<16x128xf32, #tpu.memory_space<vmem>>, vector<16x128xf32>
      %c0_i32_96 = arith.constant 0 : i32
      %260 = arith.addi %8, %c0_i32_96 : i32
      %261 = arith.index_cast %260 : i32 to index
      %c0_97 = arith.constant 0 : index
      %c0_98 = arith.constant 0 : index
      %262 = vector.load %arg4[%261, %c0_97, %c0_98] : memref<16x16x128xbf16, #tpu.memory_space<vmem>>, vector<1x16x128xbf16>
      %263 = vector.shape_cast %262 : vector<1x16x128xbf16> to vector<16x128xbf16>
      %264 = arith.extf %263 : vector<16x128xbf16> to vector<16x128xf32>
      %265 = vector.broadcast %24 : vector<1x128xf32> to vector<16x128xf32>
      %266 = arith.mulf %264, %265 : vector<16x128xf32>
      %267 = arith.addf %259, %266 : vector<16x128xf32>
      %c1_i32_99 = arith.constant 1 : i32
      %268 = arith.addi %8, %c1_i32_99 : i32
      %269 = arith.index_cast %268 : i32 to index
      %c0_100 = arith.constant 0 : index
      %c0_101 = arith.constant 0 : index
      %270 = vector.load %arg4[%269, %c0_100, %c0_101] : memref<16x16x128xbf16, #tpu.memory_space<vmem>>, vector<1x16x128xbf16>
      %271 = vector.shape_cast %270 : vector<1x16x128xbf16> to vector<16x128xbf16>
      %272 = arith.extf %271 : vector<16x128xbf16> to vector<16x128xf32>
      %273 = vector.broadcast %39 : vector<1x128xf32> to vector<16x128xf32>
      %274 = arith.mulf %272, %273 : vector<16x128xf32>
      %275 = arith.addf %267, %274 : vector<16x128xf32>
      %c2_i32_102 = arith.constant 2 : i32
      %276 = arith.addi %8, %c2_i32_102 : i32
      %277 = arith.index_cast %276 : i32 to index
      %c0_103 = arith.constant 0 : index
      %c0_104 = arith.constant 0 : index
      %278 = vector.load %arg4[%277, %c0_103, %c0_104] : memref<16x16x128xbf16, #tpu.memory_space<vmem>>, vector<1x16x128xbf16>
      %279 = vector.shape_cast %278 : vector<1x16x128xbf16> to vector<16x128xbf16>
      %280 = arith.extf %279 : vector<16x128xbf16> to vector<16x128xf32>
      %281 = vector.broadcast %60 : vector<1x128xf32> to vector<16x128xf32>
      %282 = arith.mulf %280, %281 : vector<16x128xf32>
      %283 = arith.addf %275, %282 : vector<16x128xf32>
      %c3_i32_105 = arith.constant 3 : i32
      %284 = arith.addi %8, %c3_i32_105 : i32
      %285 = arith.index_cast %284 : i32 to index
      %c0_106 = arith.constant 0 : index
      %c0_107 = arith.constant 0 : index
      %286 = vector.load %arg4[%285, %c0_106, %c0_107] : memref<16x16x128xbf16, #tpu.memory_space<vmem>>, vector<1x16x128xbf16>
      %287 = vector.shape_cast %286 : vector<1x16x128xbf16> to vector<16x128xbf16>
      %288 = arith.extf %287 : vector<16x128xbf16> to vector<16x128xf32>
      %289 = vector.broadcast %87 : vector<1x128xf32> to vector<16x128xf32>
      %290 = arith.mulf %288, %289 : vector<16x128xf32>
      %291 = arith.addf %283, %290 : vector<16x128xf32>
      %c4_i32_108 = arith.constant 4 : i32
      %292 = arith.addi %8, %c4_i32_108 : i32
      %293 = arith.index_cast %292 : i32 to index
      %c0_109 = arith.constant 0 : index
      %c0_110 = arith.constant 0 : index
      %294 = vector.load %arg4[%293, %c0_109, %c0_110] : memref<16x16x128xbf16, #tpu.memory_space<vmem>>, vector<1x16x128xbf16>
      %295 = vector.shape_cast %294 : vector<1x16x128xbf16> to vector<16x128xbf16>
      %296 = arith.extf %295 : vector<16x128xbf16> to vector<16x128xf32>
      %297 = vector.broadcast %120 : vector<1x128xf32> to vector<16x128xf32>
      %298 = arith.mulf %296, %297 : vector<16x128xf32>
      %299 = arith.addf %291, %298 : vector<16x128xf32>
      %c5_i32_111 = arith.constant 5 : i32
      %300 = arith.addi %8, %c5_i32_111 : i32
      %301 = arith.index_cast %300 : i32 to index
      %c0_112 = arith.constant 0 : index
      %c0_113 = arith.constant 0 : index
      %302 = vector.load %arg4[%301, %c0_112, %c0_113] : memref<16x16x128xbf16, #tpu.memory_space<vmem>>, vector<1x16x128xbf16>
      %303 = vector.shape_cast %302 : vector<1x16x128xbf16> to vector<16x128xbf16>
      %304 = arith.extf %303 : vector<16x128xbf16> to vector<16x128xf32>
      %305 = vector.broadcast %159 : vector<1x128xf32> to vector<16x128xf32>
      %306 = arith.mulf %304, %305 : vector<16x128xf32>
      %307 = arith.addf %299, %306 : vector<16x128xf32>
      %c6_i32_114 = arith.constant 6 : i32
      %308 = arith.addi %8, %c6_i32_114 : i32
      %309 = arith.index_cast %308 : i32 to index
      %c0_115 = arith.constant 0 : index
      %c0_116 = arith.constant 0 : index
      %310 = vector.load %arg4[%309, %c0_115, %c0_116] : memref<16x16x128xbf16, #tpu.memory_space<vmem>>, vector<1x16x128xbf16>
      %311 = vector.shape_cast %310 : vector<1x16x128xbf16> to vector<16x128xbf16>
      %312 = arith.extf %311 : vector<16x128xbf16> to vector<16x128xf32>
      %313 = vector.broadcast %204 : vector<1x128xf32> to vector<16x128xf32>
      %314 = arith.mulf %312, %313 : vector<16x128xf32>
      %315 = arith.addf %307, %314 : vector<16x128xf32>
      %c7_i32_117 = arith.constant 7 : i32
      %316 = arith.addi %8, %c7_i32_117 : i32
      %317 = arith.index_cast %316 : i32 to index
      %c0_118 = arith.constant 0 : index
      %c0_119 = arith.constant 0 : index
      %318 = vector.load %arg4[%317, %c0_118, %c0_119] : memref<16x16x128xbf16, #tpu.memory_space<vmem>>, vector<1x16x128xbf16>
      %319 = vector.shape_cast %318 : vector<1x16x128xbf16> to vector<16x128xbf16>
      %320 = arith.extf %319 : vector<16x128xbf16> to vector<16x128xf32>
      %321 = vector.broadcast %255 : vector<1x128xf32> to vector<16x128xf32>
      %322 = arith.mulf %320, %321 : vector<16x128xf32>
      %323 = arith.addf %315, %322 : vector<16x128xf32>
      %c0_120 = arith.constant 0 : index
      %c0_121 = arith.constant 0 : index
      %324 = vector.load %arg7[%c0_120, %c0_121] : memref<16x128xf32, #tpu.memory_space<vmem>>, vector<16x128xf32>
      tpu.vector_store %arg7[%c0_120, %c0_121], %323 {strides = array<i32>} : memref<16x128xf32, #tpu.memory_space<vmem>>, vector<16x128xf32>,
    }
    %c2_i32_8 = arith.constant 2 : i32
    %c1_i32_9 = arith.constant 1 : i32
    return
  }
  func.func @transform_0(%arg0: i32) -> (i32, i32) {
    %c0_i32 = arith.constant 0 : i32
    %c0_i32_0 = arith.constant 0 : i32
    return %c0_i32, %arg0 : i32, i32
  }
  func.func @transform_1(%arg0: i32) -> (i32, i32) {
    %c0_i32 = arith.constant 0 : i32
    %c0_i32_0 = arith.constant 0 : i32
    return %c0_i32, %arg0 : i32, i32
  }
  func.func @transform_2(%arg0: i32) -> (i32, i32) {
    %c0_i32 = arith.constant 0 : i32
    %c0_i32_0 = arith.constant 0 : i32
    return %c0_i32, %arg0 : i32, i32
  }
  func.func @transform_3(%arg0: i32) -> (i32, i32, i32) {
    %c0_i32 = arith.constant 0 : i32
    %c0_i32_0 = arith.constant 0 : i32
    %c0_i32_1 = arith.constant 0 : i32
    return %c0_i32, %c0_i32_0, %arg0 : i32, i32, i32
  }
  func.func @transform_4(%arg0: i32) -> (i32, i32, i32) {
    %c0_i32 = arith.constant 0 : i32
    %c0_i32_0 = arith.constant 0 : i32
    %c0_i32_1 = arith.constant 0 : i32
    return %c0_i32, %c0_i32_0, %arg0 : i32, i32, i32
  }
  func.func @transform_5(%arg0: i32) -> (i32, i32) {
    %c0_i32 = arith.constant 0 : i32
    %c0_i32_0 = arith.constant 0 : i32
    return %c0_i32, %arg0 : i32, i32
  }
  func.func @transform_6(%arg0: i32) -> (i32, i32) {
    %c0_i32 = arith.constant 0 : i32
    %c0_i32_0 = arith.constant 0 : i32
    return %c0_i32, %arg0 : i32, i32
  }
}

</mosaic_0001>

<llo_original>
// kernel: tpu_custom_call.1
$region0: #{tpu_custom_call.1}
  #allocation0 [shape = 'u32[]', space=smem, size = 0x4, offset = 0x4, fixed_abs, tag = 'smem constant byte address 0x4 - core index']
  #allocation1 [shape = 'u32[144,128]{1,0:T(1,128)}', space=vmem, size = 0x12000, scoped, tag = 'internal scratch']
  %s0 = inlined_call_operand.hbm [shape: f32[16,128], index: 0, kind: input, shape index: {}, may-alias: {0,5}]
  %s1 = inlined_call_operand.hbm [shape: f32[16,128], index: 1, kind: input, shape index: {}, may-alias: {1,6}]
  %s2 = inlined_call_operand.vmem [shape: f32[16,128], index: 2, kind: input, shape index: {}]
  %s3 = inlined_call_operand.hbm [shape: bf16[16,16,128], index: 3, kind: input, shape index: {}]
  %s4 = inlined_call_operand.hbm [shape: f32[8,16,128], index: 4, kind: input, shape index: {}]
  %s5 = inlined_call_operand.hbm [shape: f32[16,128], index: 5, kind: output, shape index: {0}, may-alias: {0,5}]
  %s6 = inlined_call_operand.hbm [shape: f32[16,128], index: 6, kind: output, shape index: {1}, may-alias: {1,6}]
  %7 = xla_tuple %s5, %s6
  %s8 = sld [smem:[#allocation0]]
  $region61: #{tpu_custom_call.1} parent=0
    _
  %s10 = ssub.s32 1, %s8
  %s11 = scalar_select 0, %s10, %s8
  $region1: #{tpu_custom_call.1} parent=0
    #allocation2 [shape = 'u8[8192]{0}', space=vmem, size = 0x2000, scoped, tag = 'input window, operand 0, single buffered']
    #allocation3 [shape = 's32[1]{0}', space=sflag, size = 0x4, scoped, tag = 'scoped memory for tpu_custom_call.1']
    #allocation4 [shape = 's32[1]{0}', space=sflag, size = 0x4, scoped, tag = 'scoped memory for tpu_custom_call.1']
    #allocation5 [shape = 'u8[8192]{0}', space=vmem, size = 0x2000, scoped, tag = 'input window, operand 1, single buffered']
    #allocation6 [shape = 's32[1]{0}', space=sflag, size = 0x4, scoped, tag = 'scoped memory for tpu_custom_call.1']
    #allocation7 [shape = 'u8[65536]{0}', space=vmem, size = 0x10000, scoped, tag = 'input window, operand 3, single buffered']
    #allocation8 [shape = 'u8[65536]{0}', space=vmem, size = 0x10000, scoped, tag = 'input window, operand 4, single buffered']
    #allocation9 [shape = 's32[1]{0}', space=sflag, size = 0x4, scoped, tag = 'scoped memory for tpu_custom_call.1']
    #allocation10 [shape = 'u8[8192]{0}', space=vmem, size = 0x2000, scoped, tag = 'output window, operand 0, single buffered']
    #allocation11 [shape = 'u8[8192]{0}', space=vmem, size = 0x2000, scoped, tag = 'output window, operand 1, single buffered']
    #allocation12 [shape = 's32[1]{0}', space=sflag, size = 0x4, scoped, tag = 'scoped memory for tpu_custom_call.1']
    %12 = vsyncpa [#allocation3], 0
    %13 = vsyncpa [#allocation6], 0
    %14 = vsyncpa [#allocation9], 0
    %15 = vsyncpa [#allocation4], 0
    %16 = vsyncpa [#allocation12], 0
    // Predicated region
    $region2: #{tpu_custom_call.1} parent=1 // pred_check
      _
    $region3: #{tpu_custom_call.1} parent=1 // pred_check_branch
      %18 = sbr.rel (0) target = $region5
    $region4: #{tpu_custom_call.1} parent=1 // pred_region
      %s20 = ssub.s32 256, 256
      %21 = vsyncadd [#allocation3], %s20
      %s22 = sshll.u32 [#allocation2], 4
      %s23 = int_to_ptr.vmem [resolvable:$true] %s22
      %28 = dma.hbm_to_vmem [thread:$0]  %s0, 256, %s23, [#allocation3], 128, 128, 8
    $region5: #{tpu_custom_call.1} parent=1 // pred_fallthru
      _
    // Predicated region
    $region6: #{tpu_custom_call.1} parent=1 // pred_check
      _
    $region7: #{tpu_custom_call.1} parent=1 // pred_check_branch
      %30 = sbr.rel (0) target = $region9
    $region8: #{tpu_custom_call.1} parent=1 // pred_region
      %s32 = ssub.s32 256, 256
      %33 = vsyncadd [#allocation6], %s32
      %s34 = sshll.u32 [#allocation5], 4
      %s35 = int_to_ptr.vmem [resolvable:$true] %s34
      %40 = dma.hbm_to_vmem [thread:$0]  %s1, 256, %s35, [#allocation6], 128, 128, 8
    $region9: #{tpu_custom_call.1} parent=1 // pred_fallthru
      _
    // Predicated region
    $region10: #{tpu_custom_call.1} parent=1 // pred_check
      _
    $region11: #{tpu_custom_call.1} parent=1 // pred_check_branch
      %42 = sbr.rel (0) target = $region13
    $region12: #{tpu_custom_call.1} parent=1 // pred_region
      _
    $region13: #{tpu_custom_call.1} parent=1 // pred_fallthru
      _
    // Predicated region
    $region14: #{tpu_custom_call.1} parent=1 // pred_check
      _
    $region15: #{tpu_custom_call.1} parent=1 // pred_check_branch
      %44 = sbr.rel (0) target = $region17
    $region16: #{tpu_custom_call.1} parent=1 // pred_region
      %s46 = ssub.s32 2048, 2048
      %47 = vsyncadd [#allocation6], %s46
      %s48 = sshll.u32 [#allocation7], 4
      %s49 = int_to_ptr.vmem [resolvable:$true] %s48
      %54 = dma.hbm_to_vmem [thread:$0]  %s3, 2048, %s49, [#allocation6], 64, 64, 4
    $region17: #{tpu_custom_call.1} parent=1 // pred_fallthru
      _
    // Predicated region
    $region18: #{tpu_custom_call.1} parent=1 // pred_check
      _
    $region19: #{tpu_custom_call.1} parent=1 // pred_check_branch
      %56 = sbr.rel (0) target = $region21
    $region20: #{tpu_custom_call.1} parent=1 // pred_region
      %s58 = ssub.s32 2048, 2048
      %59 = vsyncadd [#allocation9], %s58
      %s60 = sshll.u32 [#allocation8], 4
      %s61 = int_to_ptr.vmem [resolvable:$true] %s60
      %66 = dma.hbm_to_vmem [thread:$0]  %s4, 2048, %s61, [#allocation9], 128, 128, 8
    $region21: #{tpu_custom_call.1} parent=1 // pred_fallthru
      _
    // Predicated region
    $region22: #{tpu_custom_call.1} parent=1 // pred_check
      _
    $region23: #{tpu_custom_call.1} parent=1 // pred_check_branch
      %68 = sbr.rel (0) target = $region25
    $region24: #{tpu_custom_call.1} parent=1 // pred_region
      %69 = dma.done [#allocation3], 256
    $region25: #{tpu_custom_call.1} parent=1 // pred_fallthru
      _
    // Predicated region
    $region26: #{tpu_custom_call.1} parent=1 // pred_check
      _
    $region27: #{tpu_custom_call.1} parent=1 // pred_check_branch
      %71 = sbr.rel (0) target = $region29
    $region28: #{tpu_custom_call.1} parent=1 // pred_region
      %72 = dma.done [#allocation6], 256
    $region29: #{tpu_custom_call.1} parent=1 // pred_fallthru
      _
    // Predicated region
    $region30: #{tpu_custom_call.1} parent=1 // pred_check
      _
    $region31: #{tpu_custom_call.1} parent=1 // pred_check_branch
      %74 = sbr.rel (0) target = $region33
    $region32: #{tpu_custom_call.1} parent=1 // pred_region
      %75 = dma.done [#allocation6], 2048
    $region33: #{tpu_custom_call.1} parent=1 // pred_fallthru
      _
    // Predicated region
    $region34: #{tpu_custom_call.1} parent=1 // pred_check
      _
    $region35: #{tpu_custom_call.1} parent=1 // pred_check_branch
      %77 = sbr.rel (0) target = $region37
    $region36: #{tpu_custom_call.1} parent=1 // pred_region
      %78 = dma.done [#allocation9], 2048
    $region37: #{tpu_custom_call.1} parent=1 // pred_fallthru
      _
    %v79 = vld [vmem:[#allocation2] sm:$0xff]
    %v80 = vld [vmem:[#allocation2 + $0x8] sm:$0xff]
    %81 = vst [vmem:[#allocation10] sm:$0xff] %v79
    %82 = vst [vmem:[#allocation10 + $0x8] sm:$0xff] %v80
    %v83 = vld [vmem:[#allocation5] sm:$0xff]
    %v84 = vld [vmem:[#allocation5 + $0x8] sm:$0xff]
    %85 = vst [vmem:[#allocation11] sm:$0xff] %v83
    %86 = vst [vmem:[#allocation11 + $0x8] sm:$0xff] %v84
    loop: start=0, step=1, limit=2
    $region38: #{tpu_custom_call.1} parent=1 // loop_pre_header
      _
    $region39: #{tpu_custom_call.1} parent=1 // loop_header
      %s88 = sphi 0, %s92
      %p89 = scmp.ge.s32.totalorder %s88, 2
    $region40: #{tpu_custom_call.1} parent=1 // loop_header_branch
      %91 = sbr.rel (%p89) target = $region44
    $region41: #{tpu_custom_call.1} parent=1 // loop_body
      %s93 = smul.u32 %s88, 8
      %s94 = scalar_lea.vmem [#allocation10], %s93
      %v95 = vld [vmem:[%s94] sm:$0xff]
      %s96 = scalar_lea.vmem [#allocation11], %s93
      %v97 = vld [vmem:[%s96] sm:$0xff]
      %s98 = sadd.s32 0, %s93
      %s99 = scalar_lea.vmem %s2, %s98
      %v100 = vld [vmem:[%s99] sm:$0xff]
      %v101 = vmul.f32 %v95, %v97
      %vm102 = vcmp.gt.f32.partialorder %v100, %v101
      %v103 = vsub.f32 0.0, %v95
      %v104 = vsel %vm102, %v103, %v95
      %v105 = vsub.f32 %v104, %v95
      %s106 = sadd.s32 %s93, 1
      %s107 = scalar_lea.vmem [#allocation8], %s106
      %v108 = vld [vmem:[%s107] sm:$0x1]
      %v109 = vmul.f32 %v108, %v105
      %v111 = vrot.slane %v109, 7
      %v113 = vadd.f32 %v97, %v111
      %v114 = vmul.f32 %v95, %v113
      %vm115 = vcmp.gt.f32.partialorder %v100, %v114
      %v116 = vsel %vm115, %v103, %v95
      %v117 = vsub.f32 %v116, %v95
      %s118 = sadd.s32 %s93, 2
      %s119 = scalar_lea.vmem [#allocation8], %s118
      %v120 = vld [vmem:[%s119] sm:$0x1]
      %v121 = vmul.f32 %v120, %v105
      %v123 = vrot.slane %v121, 6
      %v125 = vadd.f32 %v97, %v123
      %s126 = sadd.s32 %s118, 16
      %s127 = scalar_lea.vmem [#allocation8], %s126
      %v128 = vld [vmem:[%s127] sm:$0x1]
      %v130 = vrot.slane %v117, 1
      %v132 = vmul.f32 %v128, %v130
      %v134 = vrot.slane %v132, 6
      %v136 = vadd.f32 %v125, %v134
      %v137 = vmul.f32 %v95, %v136
      %vm138 = vcmp.gt.f32.partialorder %v100, %v137
      %v139 = vsel %vm138, %v103, %v95
      %v140 = vsub.f32 %v139, %v95
      %s141 = sadd.s32 %s93, 3
      %s142 = scalar_lea.vmem [#allocation8], %s141
      %v143 = vld [vmem:[%s142] sm:$0x1]
      %v144 = vmul.f32 %v143, %v105
      %v146 = vrot.slane %v144, 5
      %v148 = vadd.f32 %v97, %v146
      %s149 = sadd.s32 %s141, 16
      %s150 = scalar_lea.vmem [#allocation8], %s149
      %v151 = vld [vmem:[%s150] sm:$0x1]
      %v152 = vmul.f32 %v151, %v130
      %v154 = vrot.slane %v152, 5
      %v156 = vadd.f32 %v148, %v154
      %s157 = sadd.s32 %s141, 32
      %s158 = scalar_lea.vmem [#allocation8], %s157
      %v159 = vld [vmem:[%s158] sm:$0x1]
      %v161 = vrot.slane %v140, 2
      %v163 = vmul.f32 %v159, %v161
      %v165 = vrot.slane %v163, 5
      %v167 = vadd.f32 %v156, %v165
      %v168 = vmul.f32 %v95, %v167
      %vm169 = vcmp.gt.f32.partialorder %v100, %v168
      %v170 = vsel %vm169, %v103, %v95
      %v171 = vsub.f32 %v170, %v95
      %s172 = sadd.s32 %s93, 4
      %s173 = scalar_lea.vmem [#allocation8], %s172
      %v174 = vld [vmem:[%s173] sm:$0x1]
      %v175 = vmul.f32 %v174, %v105
      %v177 = vrot.slane %v175, 4
      %v179 = vadd.f32 %v97, %v177
      %s180 = sadd.s32 %s172, 16
      %s181 = scalar_lea.vmem [#allocation8], %s180
      %v182 = vld [vmem:[%s181] sm:$0x1]
      %v183 = vmul.f32 %v182, %v130
      %v185 = vrot.slane %v183, 4
      %v187 = vadd.f32 %v179, %v185
      %s188 = sadd.s32 %s172, 32
      %s189 = scalar_lea.vmem [#allocation8], %s188
      %v190 = vld [vmem:[%s189] sm:$0x1]
      %v191 = vmul.f32 %v190, %v161
      %v193 = vrot.slane %v191, 4
      %v195 = vadd.f32 %v187, %v193
      %s196 = sadd.s32 %s172, 48
      %s197 = scalar_lea.vmem [#allocation8], %s196
      %v198 = vld [vmem:[%s197] sm:$0x1]
      %v200 = vrot.slane %v171, 3
      %v202 = vmul.f32 %v198, %v200
      %v204 = vrot.slane %v202, 4
      %v206 = vadd.f32 %v195, %v204
      %v207 = vmul.f32 %v95, %v206
      %vm208 = vcmp.gt.f32.partialorder %v100, %v207
      %v209 = vsel %vm208, %v103, %v95
      %v210 = vsub.f32 %v209, %v95
      %s211 = sadd.s32 %s93, 5
      %s212 = scalar_lea.vmem [#allocation8], %s211
      %v213 = vld [vmem:[%s212] sm:$0x1]
      %v214 = vmul.f32 %v213, %v105
      %v216 = vrot.slane %v214, 3
      %v218 = vadd.f32 %v97, %v216
      %s219 = sadd.s32 %s211, 16
      %s220 = scalar_lea.vmem [#allocation8], %s219
      %v221 = vld [vmem:[%s220] sm:$0x1]
      %v222 = vmul.f32 %v221, %v130
      %v224 = vrot.slane %v222, 3
      %v226 = vadd.f32 %v218, %v224
      %s227 = sadd.s32 %s211, 32
      %s228 = scalar_lea.vmem [#allocation8], %s227
      %v229 = vld [vmem:[%s228] sm:$0x1]
      %v230 = vmul.f32 %v229, %v161
      %v232 = vrot.slane %v230, 3
      %v234 = vadd.f32 %v226, %v232
      %s235 = sadd.s32 %s211, 48
      %s236 = scalar_lea.vmem [#allocation8], %s235
      %v237 = vld [vmem:[%s236] sm:$0x1]
      %v238 = vmul.f32 %v237, %v200
      %v240 = vrot.slane %v238, 3
      %v242 = vadd.f32 %v234, %v240
      %s243 = sadd.s32 %s211, 64
      %s244 = scalar_lea.vmem [#allocation8], %s243
      %v245 = vld [vmem:[%s244] sm:$0x1]
      %v247 = vrot.slane %v210, 4
      %v249 = vmul.f32 %v245, %v247
      %v251 = vrot.slane %v249, 3
      %v253 = vadd.f32 %v242, %v251
      %v254 = vmul.f32 %v95, %v253
      %vm255 = vcmp.gt.f32.partialorder %v100, %v254
      %v256 = vsel %vm255, %v103, %v95
      %v257 = vsub.f32 %v256, %v95
      %s258 = sadd.s32 %s93, 6
      %s259 = scalar_lea.vmem [#allocation8], %s258
      %v260 = vld [vmem:[%s259] sm:$0x1]
      %v261 = vmul.f32 %v260, %v105
      %v263 = vrot.slane %v261, 2
      %v265 = vadd.f32 %v97, %v263
      %s266 = sadd.s32 %s258, 16
      %s267 = scalar_lea.vmem [#allocation8], %s266
      %v268 = vld [vmem:[%s267] sm:$0x1]
      %v269 = vmul.f32 %v268, %v130
      %v271 = vrot.slane %v269, 2
      %v273 = vadd.f32 %v265, %v271
      %s274 = sadd.s32 %s258, 32
      %s275 = scalar_lea.vmem [#allocation8], %s274
      %v276 = vld [vmem:[%s275] sm:$0x1]
      %v277 = vmul.f32 %v276, %v161
      %v279 = vrot.slane %v277, 2
      %v281 = vadd.f32 %v273, %v279
      %s282 = sadd.s32 %s258, 48
      %s283 = scalar_lea.vmem [#allocation8], %s282
      %v284 = vld [vmem:[%s283] sm:$0x1]
      %v285 = vmul.f32 %v284, %v200
      %v287 = vrot.slane %v285, 2
      %v289 = vadd.f32 %v281, %v287
      %s290 = sadd.s32 %s258, 64
      %s291 = scalar_lea.vmem [#allocation8], %s290
      %v292 = vld [vmem:[%s291] sm:$0x1]
      %v293 = vmul.f32 %v292, %v247
      %v295 = vrot.slane %v293, 2
      %v297 = vadd.f32 %v289, %v295
      %s298 = sadd.s32 %s258, 80
      %s299 = scalar_lea.vmem [#allocation8], %s298
      %v300 = vld [vmem:[%s299] sm:$0x1]
      %v302 = vrot.slane %v257, 5
      %v304 = vmul.f32 %v300, %v302
      %v306 = vrot.slane %v304, 2
      %v308 = vadd.f32 %v297, %v306
      %v309 = vmul.f32 %v95, %v308
      %vm310 = vcmp.gt.f32.partialorder %v100, %v309
      %v311 = vsel %vm310, %v103, %v95
      %v312 = vsub.f32 %v311, %v95
      %s313 = sadd.s32 %s93, 7
      %s314 = scalar_lea.vmem [#allocation8], %s313
      %v315 = vld [vmem:[%s314] sm:$0x1]
      %v316 = vmul.f32 %v315, %v105
      %v318 = vrot.slane %v316, 1
      %v320 = vadd.f32 %v97, %v318
      %s321 = sadd.s32 %s313, 16
      %s322 = scalar_lea.vmem [#allocation8], %s321
      %v323 = vld [vmem:[%s322] sm:$0x1]
      %v324 = vmul.f32 %v323, %v130
      %v326 = vrot.slane %v324, 1
      %v328 = vadd.f32 %v320, %v326
      %s329 = sadd.s32 %s313, 32
      %s330 = scalar_lea.vmem [#allocation8], %s329
      %v331 = vld [vmem:[%s330] sm:$0x1]
      %v332 = vmul.f32 %v331, %v161
      %v334 = vrot.slane %v332, 1
      %v336 = vadd.f32 %v328, %v334
      %s337 = sadd.s32 %s313, 48
      %s338 = scalar_lea.vmem [#allocation8], %s337
      %v339 = vld [vmem:[%s338] sm:$0x1]
      %v340 = vmul.f32 %v339, %v200
      %v342 = vrot.slane %v340, 1
      %v344 = vadd.f32 %v336, %v342
      %s345 = sadd.s32 %s313, 64
      %s346 = scalar_lea.vmem [#allocation8], %s345
      %v347 = vld [vmem:[%s346] sm:$0x1]
      %v348 = vmul.f32 %v347, %v247
      %v350 = vrot.slane %v348, 1
      %v352 = vadd.f32 %v344, %v350
      %s353 = sadd.s32 %s313, 80
      %s354 = scalar_lea.vmem [#allocation8], %s353
      %v355 = vld [vmem:[%s354] sm:$0x1]
      %v356 = vmul.f32 %v355, %v302
      %v358 = vrot.slane %v356, 1
      %v360 = vadd.f32 %v352, %v358
      %s361 = sadd.s32 %s313, 96
      %s362 = scalar_lea.vmem [#allocation8], %s361
      %v363 = vld [vmem:[%s362] sm:$0x1]
      %v365 = vrot.slane %v312, 6
      %v367 = vmul.f32 %v363, %v365
      %v369 = vrot.slane %v367, 1
      %v371 = vadd.f32 %v360, %v369
      %v372 = vmul.f32 %v95, %v371
      %vm373 = vcmp.gt.f32.partialorder %v100, %v372
      %v374 = vsel %vm373, %v103, %v95
      %v375 = vsub.f32 %v374, %v95
      %vm376 = vcmask 1040384
      %v377 = vsel %vm376, %v104, %v116
      %vm378 = vcmask 1041408
      %v379 = vsel %vm378, %v377, %v139
      %vm380 = vcmask 1042432
      %v381 = vsel %vm380, %v379, %v170
      %vm382 = vcmask 1043456
      %v383 = vsel %vm382, %v381, %v209
      %vm384 = vcmask 1044480
      %v385 = vsel %vm384, %v383, %v256
      %vm386 = vcmask 1045504
      %v387 = vsel %vm386, %v385, %v311
      %vm388 = vcmask 1046528
      %v389 = vsel %vm388, %v387, %v374
      %390 = vst [vmem:[%s94] sm:$0xff] %v389
      %v391 = vld [vmem:[#allocation11] sm:$0xff]
      %v392 = vld [vmem:[#allocation11 + $0x8] sm:$0xff]
      %s393 = smul.u32 %s93, 2
      %s394 = smul.addr %s393, 4
      %s395 = scalar_lea.vmem [#allocation7], %s394
      %v396 = vld [vmem:[%s395] sm:$0xf]
      %v397 = vld [vmem:[%s395 + $0x4] sm:$0xf]
      %v398 = vunpack.c.l.bf16 %v396
      %v399 = vunpack.c.l.bf16 %v397
      %v400 = vlaneseq
      %v401 = vshrl.u32 %v400, 7
      %v402 = vsub.s32 0, %v401
      %v403 = vrot.slane %v105, %v402
      %v404 = vmul.f32 %v398, %v403
      %v405 = vmul.f32 %v399, %v403
      %v406 = vadd.f32 %v391, %v404
      %v407 = vadd.f32 %v392, %v405
      %s408 = smul.u32 %s106, 2
      %s409 = smul.addr %s408, 4
      %s410 = scalar_lea.vmem [#allocation7], %s409
      %v411 = vld [vmem:[%s410] sm:$0xf]
      %v412 = vld [vmem:[%s410 + $0x4] sm:$0xf]
      %v413 = vunpack.c.l.bf16 %v411
      %v414 = vunpack.c.l.bf16 %v412
      %v415 = vlaneseq
      %v416 = vshrl.u32 %v415, 7
      %v417 = vsub.s32 1, %v416
      %v418 = vrot.slane %v117, %v417
      %v419 = vmul.f32 %v413, %v418
      %v420 = vmul.f32 %v414, %v418
      %v421 = vadd.f32 %v406, %v419
      %v422 = vadd.f32 %v407, %v420
      %s423 = smul.u32 %s118, 2
      %s424 = smul.addr %s423, 4
      %s425 = scalar_lea.vmem [#allocation7], %s424
      %v426 = vld [vmem:[%s425] sm:$0xf]
      %v427 = vld [vmem:[%s425 + $0x4] sm:$0xf]
      %v428 = vunpack.c.l.bf16 %v426
      %v429 = vunpack.c.l.bf16 %v427
      %v430 = vlaneseq
      %v431 = vshrl.u32 %v430, 7
      %v432 = vsub.s32 2, %v431
      %v433 = vrot.slane %v140, %v432
      %v434 = vmul.f32 %v428, %v433
      %v435 = vmul.f32 %v429, %v433
      %v436 = vadd.f32 %v421, %v434
      %v437 = vadd.f32 %v422, %v435
      %s438 = smul.u32 %s141, 2
      %s439 = smul.addr %s438, 4
      %s440 = scalar_lea.vmem [#allocation7], %s439
      %v441 = vld [vmem:[%s440] sm:$0xf]
      %v442 = vld [vmem:[%s440 + $0x4] sm:$0xf]
      %v443 = vunpack.c.l.bf16 %v441
      %v444 = vunpack.c.l.bf16 %v442
      %v445 = vlaneseq
      %v446 = vshrl.u32 %v445, 7
      %v447 = vsub.s32 3, %v446
      %v448 = vrot.slane %v171, %v447
      %v449 = vmul.f32 %v443, %v448
      %v450 = vmul.f32 %v444, %v448
      %v451 = vadd.f32 %v436, %v449
      %v452 = vadd.f32 %v437, %v450
      %s453 = smul.u32 %s172, 2
      %s454 = smul.addr %s453, 4
      %s455 = scalar_lea.vmem [#allocation7], %s454
      %v456 = vld [vmem:[%s455] sm:$0xf]
      %v457 = vld [vmem:[%s455 + $0x4] sm:$0xf]
      %v458 = vunpack.c.l.bf16 %v456
      %v459 = vunpack.c.l.bf16 %v457
      %v460 = vlaneseq
      %v461 = vshrl.u32 %v460, 7
      %v462 = vsub.s32 4, %v461
      %v463 = vrot.slane %v210, %v462
      %v464 = vmul.f32 %v458, %v463
      %v465 = vmul.f32 %v459, %v463
      %v466 = vadd.f32 %v451, %v464
      %v467 = vadd.f32 %v452, %v465
      %s468 = smul.u32 %s211, 2
      %s469 = smul.addr %s468, 4
      %s470 = scalar_lea.vmem [#allocation7], %s469
      %v471 = vld [vmem:[%s470] sm:$0xf]
      %v472 = vld [vmem:[%s470 + $0x4] sm:$0xf]
      %v473 = vunpack.c.l.bf16 %v471
      %v474 = vunpack.c.l.bf16 %v472
      %v475 = vlaneseq
      %v476 = vshrl.u32 %v475, 7
      %v477 = vsub.s32 5, %v476
      %v478 = vrot.slane %v257, %v477
      %v479 = vmul.f32 %v473, %v478
      %v480 = vmul.f32 %v474, %v478
      %v481 = vadd.f32 %v466, %v479
      %v482 = vadd.f32 %v467, %v480
      %s483 = smul.u32 %s258, 2
      %s484 = smul.addr %s483, 4
      %s485 = scalar_lea.vmem [#allocation7], %s484
      %v486 = vld [vmem:[%s485] sm:$0xf]
      %v487 = vld [vmem:[%s485 + $0x4] sm:$0xf]
      %v488 = vunpack.c.l.bf16 %v486
      %v489 = vunpack.c.l.bf16 %v487
      %v490 = vlaneseq
      %v491 = vshrl.u32 %v490, 7
      %v492 = vsub.s32 6, %v491
      %v493 = vrot.slane %v312, %v492
      %v494 = vmul.f32 %v488, %v493
      %v495 = vmul.f32 %v489, %v493
      %v496 = vadd.f32 %v481, %v494
      %v497 = vadd.f32 %v482, %v495
      %s498 = smul.u32 %s313, 2
      %s499 = smul.addr %s498, 4
      %s500 = scalar_lea.vmem [#allocation7], %s499
      %v501 = vld [vmem:[%s500] sm:$0xf]
      %v502 = vld [vmem:[%s500 + $0x4] sm:$0xf]
      %v503 = vunpack.c.l.bf16 %v501
      %v504 = vunpack.c.l.bf16 %v502
      %v505 = vlaneseq
      %v506 = vshrl.u32 %v505, 7
      %v507 = vsub.s32 7, %v506
      %v508 = vrot.slane %v375, %v507
      %v509 = vmul.f32 %v503, %v508
      %v510 = vmul.f32 %v504, %v508
      %v511 = vadd.f32 %v496, %v509
      %v512 = vadd.f32 %v497, %v510
      %513 = vst [vmem:[#allocation11] sm:$0xff] %v511
      %514 = vst [vmem:[#allocation11 + $0x8] sm:$0xff] %v512
    $region42: #{tpu_custom_call.1} parent=1 // loop_footer
      %s92 = sadd.s32 1, %s88
    $region43: #{tpu_custom_call.1} parent=1 // loop_footer_branch
      %87 = sbr.rel target = $region39
    $region44: #{tpu_custom_call.1} parent=1 // loop_exit
      _
    // Predicated region
    $region45: #{tpu_custom_call.1} parent=1 // pred_check
      _
    $region46: #{tpu_custom_call.1} parent=1 // pred_check_branch
      %516 = sbr.rel (0) target = $region48
    $region47: #{tpu_custom_call.1} parent=1 // pred_region
      %s518 = ssub.s32 256, 256
      %519 = vsyncadd [#allocation4], %s518
      %s520 = sshll.u32 [#allocation10], 4
      %s521 = int_to_ptr.vmem [resolvable:$true] %s520
      %526 = dma.vmem_to_hbm [thread:$0]  %s521, 256, %s5, [#allocation4], 128, 128, 8
    $region48: #{tpu_custom_call.1} parent=1 // pred_fallthru
      _
    // Predicated region
    $region49: #{tpu_custom_call.1} parent=1 // pred_check
      _
    $region50: #{tpu_custom_call.1} parent=1 // pred_check_branch
      %528 = sbr.rel (0) target = $region52
    $region51: #{tpu_custom_call.1} parent=1 // pred_region
      %s530 = ssub.s32 256, 256
      %531 = vsyncadd [#allocation12], %s530
      %s532 = sshll.u32 [#allocation11], 4
      %s533 = int_to_ptr.vmem [resolvable:$true] %s532
      %538 = dma.vmem_to_hbm [thread:$0]  %s533, 256, %s6, [#allocation12], 128, 128, 8
    $region52: #{tpu_custom_call.1} parent=1 // pred_fallthru
      _
    // Predicated region
    $region53: #{tpu_custom_call.1} parent=1 // pred_check
      _
    $region54: #{tpu_custom_call.1} parent=1 // pred_check_branch
      %540 = sbr.rel (0) target = $region56
    $region55: #{tpu_custom_call.1} parent=1 // pred_region
      %541 = dma.done [#allocation4], 256
    $region56: #{tpu_custom_call.1} parent=1 // pred_fallthru
      _
    // Predicated region
    $region57: #{tpu_custom_call.1} parent=1 // pred_check
      _
    $region58: #{tpu_custom_call.1} parent=1 // pred_check_branch
      %543 = sbr.rel (0) target = $region60
    $region59: #{tpu_custom_call.1} parent=1 // pred_region
      %544 = dma.done [#allocation12], 256
    $region60: #{tpu_custom_call.1} parent=1 // pred_fallthru
      _
    %545 = vsyncpa [#allocation3], 1
    %546 = vsyncpa [#allocation6], 1
    %547 = vsyncpa [#allocation9], 1
    %548 = vsyncpa [#allocation4], 1
    %549 = vsyncpa [#allocation12], 1

</llo_original>
